<compile_context>
chip_gen: v5e
topology: v5e:2x2
jax: 0.10.0
libtpu: 0.0.40
codegen_flags: <defaults>
</compile_context>

<pallas_src>
import jax
import jax.numpy as jnp
from jax.experimental import pallas as pl
from jax.experimental.pallas import tpu as pltpu


# ---------------------------------------------------------------------------
# Kernel
# ---------------------------------------------------------------------------
def _make_mlp_kernel(bf16_epilogue):
    """Builds the fused MLP kernel: (Linear+ReLU) x4 -> Linear -> Tanh."""

    def relu_to_bf16(h_f32):
        if bf16_epilogue:
            # v6e/v7x: native bf16 VPU -> cast right after the f32 bias add,
            # ReLU in bf16, feed the next MXU dot directly.
            return jnp.maximum(h_f32.astype(jnp.bfloat16), 0.0)
        # v5e: no bf16 VALU path -> ReLU in f32, cast only for the next dot.
        return jnp.maximum(h_f32, 0.0).astype(jnp.bfloat16)

    def kernel(x_ref,
               w1_ref, b1_ref,
               w2_ref, b2_ref,
               w3_ref, b3_ref,
               w4_ref, b4_ref,
               w5_ref, b5_ref,
               o_ref):
        def dense(h, w_ref, b_ref):
            return jnp.dot(h, w_ref[...],
                           preferred_element_type=jnp.float32) + b_ref[...]

        # Layer 1 stays f32: K = data_dim is tiny, so this matmul is
        # MXU-latency bound and bf16 buys nothing (but costs accuracy).
        h = relu_to_bf16(dense(x_ref[...], w1_ref, b1_ref))
        h = relu_to_bf16(dense(h, w2_ref, b2_ref))
        h = relu_to_bf16(dense(h, w3_ref, b3_ref))
        h = relu_to_bf16(dense(h, w4_ref, b4_ref))
        h = dense(h, w5_ref, b5_ref)          # final Linear, f32 accumulation
        o_ref[...] = jnp.tanh(h).astype(o_ref.dtype)

    return kernel


# ---------------------------------------------------------------------------
# Tiling helpers
# ---------------------------------------------------------------------------
def _round_up(x, m):
    return ((x + m - 1) // m) * m


def _tpu_generation():
    """Best-effort TPU generation sniff ('v5' / 'v6' / 'v7' / None)."""
    try:
        kind = jax.devices()[0].device_kind.lower()
    except Exception:  # pragma: no cover - be robust off-TPU
        return None
    for gen in ("v7", "v6", "v5"):
        if gen in kind:
            return gen
    return None


def _pick_block_b(batch, *, two_core=False):
    """Batch tile: fill the MXU M dim, amortize per-step overhead.

    v5e/v6e (1 TC): as few, as large steps as possible (cap 2048).
    v7x (2 TCs):    guarantee >= 2 grid steps for B >= 256 so the 'parallel'
                    grid axis shards across both TensorCores (cap 1024).
    Always a multiple of 16 (bf16 packs 16 sublanes per vreg).
    """
    if two_core and batch >= 256:
        return min(1024, _round_up(pl.cdiv(batch, 2), 16))
    return min(2048, _round_up(batch, 16))


# ---------------------------------------------------------------------------
# Wrapper
# ---------------------------------------------------------------------------
def encoder_cont_emb_forward(x, params, *, block_b=None, bf16_epilogue=None):
    """Runs the fused Encoder_cont_emb MLP via pallas_call, tiled over batch."""
    (w1, b1), (w2, b2), (w3, b3), (w4, b4), (w5, b5) = params
    B, data_dim = x.shape
    hidden_dim = w5.shape[1]

    gen = _tpu_generation()
    if bf16_epilogue is None:
        bf16_epilogue = gen in ("v6", "v7")      # f32 epilogue on v5e / unknown
    if block_b is None:
        block_b = _pick_block_b(B, two_core=(gen == "v7"))
    assert block_b % 16 == 0, "block_b must be a multiple of 16 (bf16 sublanes)"

    # Pad ragged batches to a multiple of the tile; slice the output back.
    padded_B = _round_up(B, block_b)
    x_f32 = x.astype(jnp.float32)
    if padded_B != B:
        x_f32 = jnp.pad(x_f32, ((0, padded_B - B), (0, 0)))

    # Layer 1 stays f32; layers 2-5 matmul operands in bf16 (f32 accumulation
    # happens in-kernel via preferred_element_type).  Biases stay f32.
    ws = [w1.astype(jnp.float32)] + [w.astype(jnp.bfloat16)
                                     for w in (w2, w3, w4, w5)]
    bs = [b.astype(jnp.float32) for b in (b1, b2, b3, b4, b5)]

    # Full-array (untiled) blocks with a constant block index across the batch
    # grid, so weights / biases stay resident in VMEM.
    # TODO(synk): pipeline_mode=pl.Buffered(1) on these constant-index specs
    # would drop the redundant second buffer (~230 KB VMEM, mostly relevant on
    # v7x's smaller VMEM); left at the default to keep lowering portable.
    def full_spec(shape):
        ndim = len(shape)
        return pl.BlockSpec(shape, lambda i, _n=ndim: (0,) * _n)

    weight_args = []
    weight_specs = []
    for w, b in zip(ws, bs):
        weight_args += [w, b]
        weight_specs += [full_spec(w.shape), full_spec(b.shape)]

    grid = (padded_B // block_b,)
    in_specs = [pl.BlockSpec((block_b, data_dim), lambda i: (i, 0))] + weight_specs
    # TODO(synk): hidden_dim (32) < 128 lanes => masked partial output stores;
    # output bytes are tiny so this is acceptable.  If output bandwidth ever
    # matters, present a lane-dense (B//4, 128) slab wrapper-side instead.
    out_spec = pl.BlockSpec((block_b, hidden_dim), lambda i: (i, 0))

    # Advisory cost estimate so XLA schedules around this tiny kernel.
    dims = [data_dim] + [w.shape[1] for w in ws]
    flops = 2 * padded_B * sum(dims[i] * dims[i + 1] for i in range(5))
    bytes_accessed = (x_f32.size * x_f32.dtype.itemsize
                      + sum(int(a.size) * a.dtype.itemsize for a in weight_args)
                      + padded_B * hidden_dim * 4)
    cost = pl.CostEstimate(flops=int(flops),
                           transcendentals=int(padded_B * hidden_dim),
                           bytes_accessed=int(bytes_accessed))

    out = pl.pallas_call(
        _make_mlp_kernel(bf16_epilogue),
        out_shape=jax.ShapeDtypeStruct((padded_B, hidden_dim), jnp.float32),
        grid_spec=pltpu.PrefetchScalarGridSpec(
            num_scalar_prefetch=0,
            grid=grid,
            in_specs=in_specs,
            out_specs=out_spec,
        ),
        compiler_params=pltpu.CompilerParams(
            dimension_semantics=("parallel",),
            vmem_limit_bytes=32 * 1024 * 1024,  # safe on v5e/v6e/v7x
        ),
        cost_estimate=cost,
    )(x_f32, *weight_args)

    if padded_B != B:
        out = out[:B]
    return out


# ---------------------------------------------------------------------------
# Test harness
# ---------------------------------------------------------------------------
def init_params(key, data_dim, hidden_dim):
    """Deterministic synthetic weights; shapes match the nn.Linear layers."""
    dims = [data_dim, 2 ** 6, 2 ** 7, 2 ** 8, 2 ** 8, hidden_dim]
    params = []
    for idx in range(5):
        k_w, k_b, key = jax.random.split(key, 3)
        fan_in, fan_out = dims[idx], dims[idx + 1]
        bound = 1.0 / jnp.sqrt(fan_in)
        # stored as (in, out): transpose of PyTorch's (out, in) weight layout
        w = jax.random.uniform(k_w, (fan_in, fan_out), jnp.float32, -bound, bound)
        b = jax.random.uniform(k_b, (1, fan_out), jnp.float32, -bound, bound)
        params.append((w, b))
    return params


def reference_forward(x, params):
    h = x.astype(jnp.float32)
    for i, (w, b) in enumerate(params):
        h = h @ w + b
        if i < 4:
            h = jnp.maximum(h, 0.0)
    return jnp.tanh(h)


if __name__ == "__main__":
    data_dim = 4
    hidden_dim = 32
    batch = 16

    key = jax.random.PRNGKey(0)
    k_x, k_p = jax.random.split(key)
    x = jax.random.normal(k_x, (batch, data_dim), jnp.float32)
    params = init_params(k_p, data_dim, hidden_dim)

    out = encoder_cont_emb_forward(x, params)
    out = jax.block_until_ready(out)

    ref = reference_forward(x, params)
    assert out.shape == (batch, hidden_dim)
    # bf16 matmul operands for layers 2-5 (layer 1 + accumulation in f32)
    # => relaxed tolerance vs the pure-f32 reference.
    assert jnp.allclose(out, ref, atol=3e-2, rtol=3e-2), "mismatch vs reference"

    print("KERNEL_OK")
</pallas_src>

<mosaic_0001>
module attributes {stable_mosaic.version = 11 : i64} {
  func.func @kernel(%arg0: i32, %arg1: memref<16x4xf32, #tpu.memory_space<vmem>>, %arg2: memref<4x64xf32, #tpu.memory_space<vmem>>, %arg3: memref<1x64xf32, #tpu.memory_space<vmem>>, %arg4: memref<64x128xbf16, #tpu.memory_space<vmem>>, %arg5: memref<1x128xf32, #tpu.memory_space<vmem>>, %arg6: memref<128x256xbf16, #tpu.memory_space<vmem>>, %arg7: memref<1x256xf32, #tpu.memory_space<vmem>>, %arg8: memref<256x256xbf16, #tpu.memory_space<vmem>>, %arg9: memref<1x256xf32, #tpu.memory_space<vmem>>, %arg10: memref<256x32xbf16, #tpu.memory_space<vmem>>, %arg11: memref<1x32xf32, #tpu.memory_space<vmem>>, %arg12: memref<16x32xf32, #tpu.memory_space<vmem>>) attributes {dimension_semantics = [#tpu.dimension_semantics<parallel>], iteration_bounds = array<i64: 1>, scalar_prefetch = 0 : i64, scratch_operands = 0 : i64, tpu.core_type = #tpu.core_type<tc>, window_params = [{transform_indices = @transform_0, window_bounds = array<i64: 16, 4>}, {pipeline_mode = #tpu.pipeline_mode<synchronous>, transform_indices = @transform_1, window_bounds = array<i64: 4, 64>}, {pipeline_mode = #tpu.pipeline_mode<synchronous>, transform_indices = @transform_2, window_bounds = array<i64: 1, 64>}, {pipeline_mode = #tpu.pipeline_mode<synchronous>, transform_indices = @transform_3, window_bounds = array<i64: 64, 128>}, {pipeline_mode = #tpu.pipeline_mode<synchronous>, transform_indices = @transform_4, window_bounds = array<i64: 1, 128>}, {pipeline_mode = #tpu.pipeline_mode<synchronous>, transform_indices = @transform_5, window_bounds = array<i64: 128, 256>}, {pipeline_mode = #tpu.pipeline_mode<synchronous>, transform_indices = @transform_6, window_bounds = array<i64: 1, 256>}, {pipeline_mode = #tpu.pipeline_mode<synchronous>, transform_indices = @transform_7, window_bounds = array<i64: 256, 256>}, {pipeline_mode = #tpu.pipeline_mode<synchronous>, transform_indices = @transform_8, window_bounds = array<i64: 1, 256>}, {pipeline_mode = #tpu.pipeline_mode<synchronous>, transform_indices = @transform_9, window_bounds = array<i64: 256, 32>}, {pipeline_mode = #tpu.pipeline_mode<synchronous>, transform_indices = @transform_10, window_bounds = array<i64: 1, 32>}, {transform_indices = @transform_11, window_bounds = array<i64: 16, 32>}]} {
    %c0 = arith.constant 0 : index
    %c0_0 = arith.constant 0 : index
    %0 = vector.load %arg1[%c0, %c0_0] : memref<16x4xf32, #tpu.memory_space<vmem>>, vector<16x4xf32>
    %c0_1 = arith.constant 0 : index
    %c0_2 = arith.constant 0 : index
    %1 = vector.load %arg2[%c0_1, %c0_2] : memref<4x64xf32, #tpu.memory_space<vmem>>, vector<4x64xf32>
    %cst = arith.constant dense<0.000000e+00> : vector<16x64xf32>
    %2 = tpu.matmul %0, %1, %cst {dimension_numbers = #tpu.dot_dimension_numbers<[1], [0], [0], [1], [0, 0, 1, 1], [], []>} : vector<16x4xf32>, vector<4x64xf32>, vector<16x64xf32> -> vector<16x64xf32>
    %c0_3 = arith.constant 0 : index
    %c0_4 = arith.constant 0 : index
    %3 = vector.load %arg3[%c0_3, %c0_4] : memref<1x64xf32, #tpu.memory_space<vmem>>, vector<1x64xf32>
    %4 = vector.broadcast %3 : vector<1x64xf32> to vector<16x64xf32>
    %5 = arith.addf %2, %4 : vector<16x64xf32>
    %cst_5 = arith.constant 0.000000e+00 : f32
    %6 = vector.broadcast %cst_5 : f32 to vector<16x64xf32>
    %7 = arith.maximumf %5, %6 : vector<16x64xf32>
    %8 = arith.truncf %7 : vector<16x64xf32> to vector<16x64xbf16>
    %c0_6 = arith.constant 0 : index
    %c0_7 = arith.constant 0 : index
    %9 = vector.load %arg4[%c0_6, %c0_7] : memref<64x128xbf16, #tpu.memory_space<vmem>>, vector<64x128xbf16>
    %cst_8 = arith.constant dense<0.000000e+00> : vector<16x128xf32>
    %10 = tpu.matmul %8, %9, %cst_8 {dimension_numbers = #tpu.dot_dimension_numbers<[1], [0], [0], [1], [0, 0, 1, 1], [], []>} : vector<16x64xbf16>, vector<64x128xbf16>, vector<16x128xf32> -> vector<16x128xf32>
    %c0_9 = arith.constant 0 : index
    %c0_10 = arith.constant 0 : index
    %11 = vector.load %arg5[%c0_9, %c0_10] : memref<1x128xf32, #tpu.memory_space<vmem>>, vector<1x128xf32>
    %12 = vector.broadcast %11 : vector<1x128xf32> to vector<16x128xf32>
    %13 = arith.addf %10, %12 : vector<16x128xf32>
    %cst_11 = arith.constant 0.000000e+00 : f32
    %14 = vector.broadcast %cst_11 : f32 to vector<16x128xf32>
    %15 = arith.maximumf %13, %14 : vector<16x128xf32>
    %16 = arith.truncf %15 : vector<16x128xf32> to vector<16x128xbf16>
    %c0_12 = arith.constant 0 : index
    %c0_13 = arith.constant 0 : index
    %17 = vector.load %arg6[%c0_12, %c0_13] : memref<128x256xbf16, #tpu.memory_space<vmem>>, vector<128x256xbf16>
    %cst_14 = arith.constant dense<0.000000e+00> : vector<16x256xf32>
    %18 = tpu.matmul %16, %17, %cst_14 {dimension_numbers = #tpu.dot_dimension_numbers<[1], [0], [0], [1], [0, 0, 1, 1], [], []>} : vector<16x128xbf16>, vector<128x256xbf16>, vector<16x256xf32> -> vector<16x256xf32>
    %c0_15 = arith.constant 0 : index
    %c0_16 = arith.constant 0 : index
    %19 = vector.load %arg7[%c0_15, %c0_16] : memref<1x256xf32, #tpu.memory_space<vmem>>, vector<1x256xf32>
    %20 = vector.broadcast %19 : vector<1x256xf32> to vector<16x256xf32>
    %21 = arith.addf %18, %20 : vector<16x256xf32>
    %cst_17 = arith.constant 0.000000e+00 : f32
    %22 = vector.broadcast %cst_17 : f32 to vector<16x256xf32>
    %23 = arith.maximumf %21, %22 : vector<16x256xf32>
    %24 = arith.truncf %23 : vector<16x256xf32> to vector<16x256xbf16>
    %c0_18 = arith.constant 0 : index
    %c0_19 = arith.constant 0 : index
    %25 = vector.load %arg8[%c0_18, %c0_19] : memref<256x256xbf16, #tpu.memory_space<vmem>>, vector<256x256xbf16>
    %cst_20 = arith.constant dense<0.000000e+00> : vector<16x256xf32>
    %26 = tpu.matmul %24, %25, %cst_20 {dimension_numbers = #tpu.dot_dimension_numbers<[1], [0], [0], [1], [0, 0, 1, 1], [], []>} : vector<16x256xbf16>, vector<256x256xbf16>, vector<16x256xf32> -> vector<16x256xf32>
    %c0_21 = arith.constant 0 : index
    %c0_22 = arith.constant 0 : index
    %27 = vector.load %arg9[%c0_21, %c0_22] : memref<1x256xf32, #tpu.memory_space<vmem>>, vector<1x256xf32>
    %28 = vector.broadcast %27 : vector<1x256xf32> to vector<16x256xf32>
    %29 = arith.addf %26, %28 : vector<16x256xf32>
    %cst_23 = arith.constant 0.000000e+00 : f32
    %30 = vector.broadcast %cst_23 : f32 to vector<16x256xf32>
    %31 = arith.maximumf %29, %30 : vector<16x256xf32>
    %32 = arith.truncf %31 : vector<16x256xf32> to vector<16x256xbf16>
    %c0_24 = arith.constant 0 : index
    %c0_25 = arith.constant 0 : index
    %33 = vector.load %arg10[%c0_24, %c0_25] : memref<256x32xbf16, #tpu.memory_space<vmem>>, vector<256x32xbf16>
    %cst_26 = arith.constant dense<0.000000e+00> : vector<16x32xf32>
    %34 = tpu.matmul %32, %33, %cst_26 {dimension_numbers = #tpu.dot_dimension_numbers<[1], [0], [0], [1], [0, 0, 1, 1], [], []>} : vector<16x256xbf16>, vector<256x32xbf16>, vector<16x32xf32> -> vector<16x32xf32>
    %c0_27 = arith.constant 0 : index
    %c0_28 = arith.constant 0 : index
    %35 = vector.load %arg11[%c0_27, %c0_28] : memref<1x32xf32, #tpu.memory_space<vmem>>, vector<1x32xf32>
    %36 = vector.broadcast %35 : vector<1x32xf32> to vector<16x32xf32>
    %37 = arith.addf %34, %36 : vector<16x32xf32>
    %38 = math.tanh %37 : vector<16x32xf32>
    %c0_29 = arith.constant 0 : index
    %c0_30 = arith.constant 0 : index
    %39 = vector.load %arg12[%c0_29, %c0_30] : memref<16x32xf32, #tpu.memory_space<vmem>>, vector<16x32xf32>
    tpu.vector_store %arg12[%c0_29, %c0_30], %38 {strides = array<i32>} : memref<16x32xf32, #tpu.memory_space<vmem>>, vector<16x32xf32>,
    return
  }
  func.func @transform_0(%arg0: i32) -> (i32, i32) {
    %c0_i32 = arith.constant 0 : i32
    %c0_i32_0 = arith.constant 0 : i32
    return %arg0, %c0_i32 : i32, i32
  }
  func.func @transform_1(%arg0: i32) -> (i32, i32) {
    %c0_i32 = arith.constant 0 : i32
    %c0_i32_0 = arith.constant 0 : i32
    %c0_i32_1 = arith.constant 0 : i32
    return %c0_i32, %c0_i32_0 : i32, i32
  }
  func.func @transform_2(%arg0: i32) -> (i32, i32) {
    %c0_i32 = arith.constant 0 : i32
    %c0_i32_0 = arith.constant 0 : i32
    %c0_i32_1 = arith.constant 0 : i32
    return %c0_i32, %c0_i32_0 : i32, i32
  }
  func.func @transform_3(%arg0: i32) -> (i32, i32) {
    %c0_i32 = arith.constant 0 : i32
    %c0_i32_0 = arith.constant 0 : i32
    %c0_i32_1 = arith.constant 0 : i32
    return %c0_i32, %c0_i32_0 : i32, i32
  }
  func.func @transform_4(%arg0: i32) -> (i32, i32) {
    %c0_i32 = arith.constant 0 : i32
    %c0_i32_0 = arith.constant 0 : i32
    %c0_i32_1 = arith.constant 0 : i32
    return %c0_i32, %c0_i32_0 : i32, i32
  }
  func.func @transform_5(%arg0: i32) -> (i32, i32) {
    %c0_i32 = arith.constant 0 : i32
    %c0_i32_0 = arith.constant 0 : i32
    %c0_i32_1 = arith.constant 0 : i32
    return %c0_i32, %c0_i32_0 : i32, i32
  }
  func.func @transform_6(%arg0: i32) -> (i32, i32) {
    %c0_i32 = arith.constant 0 : i32
    %c0_i32_0 = arith.constant 0 : i32
    %c0_i32_1 = arith.constant 0 : i32
    return %c0_i32, %c0_i32_0 : i32, i32
  }
  func.func @transform_7(%arg0: i32) -> (i32, i32) {
    %c0_i32 = arith.constant 0 : i32
    %c0_i32_0 = arith.constant 0 : i32
    %c0_i32_1 = arith.constant 0 : i32
    return %c0_i32, %c0_i32_0 : i32, i32
  }
  func.func @transform_8(%arg0: i32) -> (i32, i32) {
    %c0_i32 = arith.constant 0 : i32
    %c0_i32_0 = arith.constant 0 : i32
    %c0_i32_1 = arith.constant 0 : i32
    return %c0_i32, %c0_i32_0 : i32, i32
  }
  func.func @transform_9(%arg0: i32) -> (i32, i32) {
    %c0_i32 = arith.constant 0 : i32
    %c0_i32_0 = arith.constant 0 : i32
    %c0_i32_1 = arith.constant 0 : i32
    return %c0_i32, %c0_i32_0 : i32, i32
  }
  func.func @transform_10(%arg0: i32) -> (i32, i32) {
    %c0_i32 = arith.constant 0 : i32
    %c0_i32_0 = arith.constant 0 : i32
    %c0_i32_1 = arith.constant 0 : i32
    return %c0_i32, %c0_i32_0 : i32, i32
  }
  func.func @transform_11(%arg0: i32) -> (i32, i32) {
    %c0_i32 = arith.constant 0 : i32
    %c0_i32_0 = arith.constant 0 : i32
    return %arg0, %c0_i32 : i32, i32
  }
}

</mosaic_0001>

<llo_original>
// kernel: tpu_custom_call.1
$region0: #{tpu_custom_call.1}
  #allocation0 [shape = 'u32[]', space=smem, size = 0x4, offset = 0x4, fixed_abs, tag = 'smem constant byte address 0x4 - core index']
  #allocation1 [shape = 'u32[72,128]{1,0:T(1,128)}', space=vmem, size = 0x9000, scoped, tag = 'internal scratch']
  %s0 = inlined_call_operand.vmem [shape: f32[16,4], index: 0, kind: input, shape index: {}]
  %s1 = inlined_call_operand.vmem [shape: f32[4,64], index: 1, kind: input, shape index: {}]
  %s2 = inlined_call_operand.vmem [shape: f32[1,64], index: 2, kind: input, shape index: {}]
  %s3 = inlined_call_operand.vmem [shape: bf16[64,128], index: 3, kind: input, shape index: {}]
  %s4 = inlined_call_operand.vmem [shape: f32[1,128], index: 4, kind: input, shape index: {}]
  %s5 = inlined_call_operand.vmem [shape: bf16[128,256], index: 5, kind: input, shape index: {}]
  %s6 = inlined_call_operand.vmem [shape: f32[1,256], index: 6, kind: input, shape index: {}]
  %s7 = inlined_call_operand.hbm [shape: bf16[256,256], index: 7, kind: input, shape index: {}]
  %s8 = inlined_call_operand.vmem [shape: f32[1,256], index: 8, kind: input, shape index: {}]
  %s9 = inlined_call_operand.vmem [shape: bf16[256,32], index: 9, kind: input, shape index: {}]
  %s10 = inlined_call_operand.vmem [shape: f32[1,32], index: 10, kind: input, shape index: {}]
  %s11 = inlined_call_operand.hbm [shape: f32[16,32], index: 11, kind: output, shape index: {}]
  %s12 = sld [smem:[#allocation0]]
  $region58: #{tpu_custom_call.1} parent=0
    _
  %s14 = ssub.s32 1, %s12
  %s15 = scalar_select 0, %s14, %s12
  $region1: #{tpu_custom_call.1} parent=0
    #allocation2 [shape = 'u8[131072]{0}', space=vmem, size = 0x20000, scoped, tag = 'input window, operand 7, single buffered']
    #allocation3 [shape = 's32[1]{0}', space=sflag, size = 0x4, scoped, tag = 'scoped memory for tpu_custom_call.1']
    #allocation4 [shape = 's32[1]{0}', space=sflag, size = 0x4, scoped, tag = 'scoped memory for tpu_custom_call.1']
    #allocation5 [shape = 'u8[8192]{0}', space=vmem, size = 0x2000, scoped, tag = 'output window, operand 0, single buffered']
    %16 = vsyncpa [#allocation3], 0
    %17 = vsyncpa [#allocation4], 0
    // Predicated region
    $region2: #{tpu_custom_call.1} parent=1 // pred_check
      _
    $region3: #{tpu_custom_call.1} parent=1 // pred_check_branch
      %19 = sbr.rel (0) target = $region5
    $region4: #{tpu_custom_call.1} parent=1 // pred_region
      _
    $region5: #{tpu_custom_call.1} parent=1 // pred_fallthru
      _
    // Predicated region
    $region6: #{tpu_custom_call.1} parent=1 // pred_check
      _
    $region7: #{tpu_custom_call.1} parent=1 // pred_check_branch
      %21 = sbr.rel (0) target = $region9
    $region8: #{tpu_custom_call.1} parent=1 // pred_region
      _
    $region9: #{tpu_custom_call.1} parent=1 // pred_fallthru
      _
    // Predicated region
    $region10: #{tpu_custom_call.1} parent=1 // pred_check
      _
    $region11: #{tpu_custom_call.1} parent=1 // pred_check_branch
      %23 = sbr.rel (0) target = $region13
    $region12: #{tpu_custom_call.1} parent=1 // pred_region
      _
    $region13: #{tpu_custom_call.1} parent=1 // pred_fallthru
      _
    // Predicated region
    $region14: #{tpu_custom_call.1} parent=1 // pred_check
      _
    $region15: #{tpu_custom_call.1} parent=1 // pred_check_branch
      %25 = sbr.rel (0) target = $region17
    $region16: #{tpu_custom_call.1} parent=1 // pred_region
      _
    $region17: #{tpu_custom_call.1} parent=1 // pred_fallthru
      _
    // Predicated region
    $region18: #{tpu_custom_call.1} parent=1 // pred_check
      _
    $region19: #{tpu_custom_call.1} parent=1 // pred_check_branch
      %27 = sbr.rel (0) target = $region21
    $region20: #{tpu_custom_call.1} parent=1 // pred_region
      _
    $region21: #{tpu_custom_call.1} parent=1 // pred_fallthru
      _
    // Predicated region
    $region22: #{tpu_custom_call.1} parent=1 // pred_check
      _
    $region23: #{tpu_custom_call.1} parent=1 // pred_check_branch
      %29 = sbr.rel (0) target = $region25
    $region24: #{tpu_custom_call.1} parent=1 // pred_region
      _
    $region25: #{tpu_custom_call.1} parent=1 // pred_fallthru
      _
    // Predicated region
    $region26: #{tpu_custom_call.1} parent=1 // pred_check
      _
    $region27: #{tpu_custom_call.1} parent=1 // pred_check_branch
      %31 = sbr.rel (0) target = $region29
    $region28: #{tpu_custom_call.1} parent=1 // pred_region
      _
    $region29: #{tpu_custom_call.1} parent=1 // pred_fallthru
      _
    // Predicated region
    $region30: #{tpu_custom_call.1} parent=1 // pred_check
      _
    $region31: #{tpu_custom_call.1} parent=1 // pred_check_branch
      %33 = sbr.rel (0) target = $region33
    $region32: #{tpu_custom_call.1} parent=1 // pred_region
      %35 = vsyncadd [#allocation3], 0
      %s36 = sshll.u32 %s7, 4
      %s37 = int_to_ptr.hbm [resolvable:$true] %s36
      %s38 = sshll.u32 [#allocation2], 4
      %s39 = int_to_ptr.vmem [resolvable:$true] %s38
      %44 = dma.hbm_to_vmem [thread:$0]  %s37, 4096, %s39, [#allocation3], 128, 128, 8
    $region33: #{tpu_custom_call.1} parent=1 // pred_fallthru
      _
    // Predicated region
    $region34: #{tpu_custom_call.1} parent=1 // pred_check
      _
    $region35: #{tpu_custom_call.1} parent=1 // pred_check_branch
      %46 = sbr.rel (0) target = $region37
    $region36: #{tpu_custom_call.1} parent=1 // pred_region
      _
    $region37: #{tpu_custom_call.1} parent=1 // pred_fallthru
      _
    // Predicated region
    $region38: #{tpu_custom_call.1} parent=1 // pred_check
      _
    $region39: #{tpu_custom_call.1} parent=1 // pred_check_branch
      %48 = sbr.rel (0) target = $region41
    $region40: #{tpu_custom_call.1} parent=1 // pred_region
      _
    $region41: #{tpu_custom_call.1} parent=1 // pred_fallthru
      _
    // Predicated region
    $region42: #{tpu_custom_call.1} parent=1 // pred_check
      _
    $region43: #{tpu_custom_call.1} parent=1 // pred_check_branch
      %50 = sbr.rel (0) target = $region45
    $region44: #{tpu_custom_call.1} parent=1 // pred_region
      _
    $region45: #{tpu_custom_call.1} parent=1 // pred_fallthru
      _
    // Predicated region
    $region46: #{tpu_custom_call.1} parent=1 // pred_check
      _
    $region47: #{tpu_custom_call.1} parent=1 // pred_check_branch
      %52 = sbr.rel (0) target = $region49
    $region48: #{tpu_custom_call.1} parent=1 // pred_region
      %54 = dma.done [#allocation3], 4096
    $region49: #{tpu_custom_call.1} parent=1 // pred_fallthru
      _
    %v56 = vld [vmem:[%s0] sm:$0xff]
    %v57 = vld [vmem:[%s0 + $0x8] sm:$0xff]
    %v58 = vld [vmem:[%s1] sm:$0xf]
    %v59 = vld [vmem:[%s2] sm:$0x1]
    %v61 = vperm.slane %v59, 0
    %vm63 = vcmask 31744
    %v65 = vsel %vm63, %v56, 0
    %v68 = vsel %vm63, %v57, 0
    %vm70 = vcmask 1043456
    %v72 = vsel %vm70, %v58, 0
    %74 = vmatpush.msra.mxu0 0.0
    %75 = vmatpush.msra.mxu0 0.0
    %76 = vmatpush.msra.mxu0 0.0
    %77 = vmatpush.msra.mxu0 0.0
    %78 = vmatpush.msra.mxu0 0.0
    %79 = vmatpush.msra.mxu0 0.0
    %80 = vmatpush.msra.mxu0 0.0
    %81 = vmatpush.msra.mxu0 0.0
    %82 = vmatpush.msra.mxu0 0.0
    %83 = vmatpush.msra.mxu0 0.0
    %84 = vmatpush.msra.mxu0 0.0
    %85 = vmatpush.msra.mxu0 0.0
    %86 = vmatpush.msra.mxu0 0.0
    %87 = vmatpush.msra.mxu0 0.0
    %88 = vmatpush.msra.mxu0 0.0
    %89 = vmatpush.msra.mxu0 %v72
    %90 = vmatmul.f32.gmra.mxu0 %v65
    %v91 = vpop.f32.mrf.mxu0
    %v92 = vadd.f32 %v61, %v91
    %93 = vmatmul.f32.gmra.mxu0 %v68
    %v94 = vpop.f32.mrf.mxu0
    %v95 = vadd.f32 %v61, %v94
    %96 = vdwg.mxu0
    %v97 = vmax.f32 %v92, 0.0
    %v98 = vmax.f32 %v95, 0.0
    %v99 = vpack.c.bf16 %v98, %v97
    %v100 = vld [vmem:[%s3] sm:$0xf]
    %v101 = vld [vmem:[%s3 + $0x4] sm:$0xf]
    %v102 = vld [vmem:[%s3 + $0x8] sm:$0xf]
    %v103 = vld [vmem:[%s3 + $0xc] sm:$0xf]
    %v104 = vld [vmem:[%s3 + $0x10] sm:$0xf]
    %v105 = vld [vmem:[%s3 + $0x14] sm:$0xf]
    %v106 = vld [vmem:[%s3 + $0x18] sm:$0xf]
    %v107 = vld [vmem:[%s3 + $0x1c] sm:$0xf]
    %v108 = vld [vmem:[%s4] sm:$0x1]
    %v110 = vperm.slane %v108, 0
    %v120 = vunpack.c.l.b16 %v100
    %v121 = vunpack.c.l.b16 %v101
    %v122 = vunpack.c.l.b16 %v102
    %v123 = vunpack.c.l.b16 %v103
    %v124 = vunpack.c.l.b16 %v104
    %v125 = vunpack.c.l.b16 %v105
    %v126 = vunpack.c.l.b16 %v106
    %v127 = vunpack.c.l.b16 %v107
    %v128 = vpack.c.b16 %v121, %v120
    %v129 = vpack.c.b16 %v123, %v122
    %v130 = vpack.c.b16 %v125, %v124
    %v131 = vpack.c.b16 %v127, %v126
    %vm136 = vcmask 523264
    %v138 = vsel %vm136, %v99, 0
    %140 = vmatpush.bf16.msra.mxu0 0
    %141 = vmatpush.bf16.msra.mxu0 0
    %142 = vmatpush.bf16.msra.mxu0 0
    %143 = vmatpush.bf16.msra.mxu0 0
    %144 = vmatpush.bf16.msra.mxu0 %v131
    %145 = vmatpush.bf16.msra.mxu0 %v130
    %146 = vmatpush.bf16.msra.mxu0 %v129
    %147 = vmatpush.bf16.msra.mxu0 %v128
    %148 = vmatmul.bf16.gmra.mxu0 %v138
    %v149 = vpop.f32.mrf.mxu0
    %v150 = vadd.f32 %v110, %v149
    %v151 = vpop.f32.mrf.mxu0
    %v152 = vadd.f32 %v110, %v151
    %153 = vdwg.mxu0
    %v154 = vmax.f32 %v150, 0.0
    %v155 = vmax.f32 %v152, 0.0
    %v156 = vpack.c.bf16 %v155, %v154
    %v157 = vld [vmem:[%s5] sm:$0xff]
    %v158 = vld [vmem:[%s5 + $0x8] sm:$0xff]
    %v159 = vld [vmem:[%s5 + $0x10] sm:$0xff]
    %v160 = vld [vmem:[%s5 + $0x18] sm:$0xff]
    %v161 = vld [vmem:[%s5 + $0x20] sm:$0xff]
    %v162 = vld [vmem:[%s5 + $0x28] sm:$0xff]
    %v163 = vld [vmem:[%s5 + $0x30] sm:$0xff]
    %v164 = vld [vmem:[%s5 + $0x38] sm:$0xff]
    %v165 = vld [vmem:[%s5 + $0x40] sm:$0xff]
    %v166 = vld [vmem:[%s5 + $0x48] sm:$0xff]
    %v167 = vld [vmem:[%s5 + $0x50] sm:$0xff]
    %v168 = vld [vmem:[%s5 + $0x58] sm:$0xff]
    %v169 = vld [vmem:[%s5 + $0x60] sm:$0xff]
    %v170 = vld [vmem:[%s5 + $0x68] sm:$0xff]
    %v171 = vld [vmem:[%s5 + $0x70] sm:$0xff]
    %v172 = vld [vmem:[%s5 + $0x78] sm:$0xff]
    %v173 = vld [vmem:[%s6] sm:$0x3]
    %v175 = vperm.slane %v173, 0
    %v176 = vperm.slane %v173, 1
    %v195 = vunpack.c.l.b16 %v157
    %v196 = vunpack.c.h.b16 %v157
    %v197 = vunpack.c.l.b16 %v158
    %v198 = vunpack.c.h.b16 %v158
    %v199 = vunpack.c.l.b16 %v159
    %v200 = vunpack.c.h.b16 %v159
    %v201 = vunpack.c.l.b16 %v160
    %v202 = vunpack.c.h.b16 %v160
    %v203 = vunpack.c.l.b16 %v161
    %v204 = vunpack.c.h.b16 %v161
    %v205 = vunpack.c.l.b16 %v162
    %v206 = vunpack.c.h.b16 %v162
    %v207 = vunpack.c.l.b16 %v163
    %v208 = vunpack.c.h.b16 %v163
    %v209 = vunpack.c.l.b16 %v164
    %v210 = vunpack.c.h.b16 %v164
    %v211 = vunpack.c.l.b16 %v165
    %v212 = vunpack.c.h.b16 %v165
    %v213 = vunpack.c.l.b16 %v166
    %v214 = vunpack.c.h.b16 %v166
    %v215 = vunpack.c.l.b16 %v167
    %v216 = vunpack.c.h.b16 %v167
    %v217 = vunpack.c.l.b16 %v168
    %v218 = vunpack.c.h.b16 %v168
    %v219 = vunpack.c.l.b16 %v169
    %v220 = vunpack.c.h.b16 %v169
    %v221 = vunpack.c.l.b16 %v170
    %v222 = vunpack.c.h.b16 %v170
    %v223 = vunpack.c.l.b16 %v171
    %v224 = vunpack.c.h.b16 %v171
    %v225 = vunpack.c.l.b16 %v172
    %v226 = vunpack.c.h.b16 %v172
    %v227 = vpack.c.b16 %v197, %v195
    %v228 = vpack.c.b16 %v198, %v196
    %v229 = vpack.c.b16 %v201, %v199
    %v230 = vpack.c.b16 %v202, %v200
    %v231 = vpack.c.b16 %v205, %v203
    %v232 = vpack.c.b16 %v206, %v204
    %v233 = vpack.c.b16 %v209, %v207
    %v234 = vpack.c.b16 %v210, %v208
    %v235 = vpack.c.b16 %v213, %v211
    %v236 = vpack.c.b16 %v214, %v212
    %v237 = vpack.c.b16 %v217, %v215
    %v238 = vpack.c.b16 %v218, %v216
    %v239 = vpack.c.b16 %v221, %v219
    %v240 = vpack.c.b16 %v222, %v220
    %v241 = vpack.c.b16 %v225, %v223
    %v242 = vpack.c.b16 %v226, %v224
    %259 = vmatpush.bf16.msra.mxu0 %v241
    %260 = vmatpush.bf16.msra.mxu0 %v239
    %261 = vmatpush.bf16.msra.mxu0 %v237
    %262 = vmatpush.bf16.msra.mxu0 %v235
    %263 = vmatpush.bf16.msra.mxu0 %v233
    %264 = vmatpush.bf16.msra.mxu0 %v231
    %265 = vmatpush.bf16.msra.mxu0 %v229
    %266 = vmatpush.bf16.msra.mxu0 %v227
    %267 = vmatmul.bf16.gmra.mxu0 %v156
    %v268 = vpop.f32.mrf.mxu0
    %v269 = vadd.f32 %v175, %v268
    %v270 = vpop.f32.mrf.mxu0
    %v271 = vadd.f32 %v175, %v270
    %272 = vdwg.mxu0
    %273 = vmatpush.bf16.msra.mxu0 %v242
    %274 = vmatpush.bf16.msra.mxu0 %v240
    %275 = vmatpush.bf16.msra.mxu0 %v238
    %276 = vmatpush.bf16.msra.mxu0 %v236
    %277 = vmatpush.bf16.msra.mxu0 %v234
    %278 = vmatpush.bf16.msra.mxu0 %v232
    %279 = vmatpush.bf16.msra.mxu0 %v230
    %280 = vmatpush.bf16.msra.mxu0 %v228
    %281 = vmatmul.bf16.gmra.mxu0 %v156
    %v282 = vpop.f32.mrf.mxu0
    %v283 = vadd.f32 %v176, %v282
    %v284 = vpop.f32.mrf.mxu0
    %v285 = vadd.f32 %v176, %v284
    %286 = vdwg.mxu0
    %v287 = vmax.f32 %v269, 0.0
    %v288 = vmax.f32 %v283, 0.0
    %v289 = vmax.f32 %v271, 0.0
    %v290 = vmax.f32 %v285, 0.0
    %v291 = vpack.c.bf16 %v289, %v287
    %v292 = vpack.c.bf16 %v290, %v288
    %v293 = vld [vmem:[#allocation2] sm:$0xff]
    %v294 = vld [vmem:[#allocation2 + $0x8] sm:$0xff]
    %v295 = vld [vmem:[#allocation2 + $0x10] sm:$0xff]
    %v296 = vld [vmem:[#allocation2 + $0x18] sm:$0xff]
    %v297 = vld [vmem:[#allocation2 + $0x20] sm:$0xff]
    %v298 = vld [vmem:[#allocation2 + $0x28] sm:$0xff]
    %v299 = vld [vmem:[#allocation2 + $0x30] sm:$0xff]
    %v300 = vld [vmem:[#allocation2 + $0x38] sm:$0xff]
    %v301 = vld [vmem:[#allocation2 + $0x40] sm:$0xff]
    %v302 = vld [vmem:[#allocation2 + $0x48] sm:$0xff]
    %v303 = vld [vmem:[#allocation2 + $0x50] sm:$0xff]
    %v304 = vld [vmem:[#allocation2 + $0x58] sm:$0xff]
    %v305 = vld [vmem:[#allocation2 + $0x60] sm:$0xff]
    %v306 = vld [vmem:[#allocation2 + $0x68] sm:$0xff]
    %v307 = vld [vmem:[#allocation2 + $0x70] sm:$0xff]
    %v308 = vld [vmem:[#allocation2 + $0x78] sm:$0xff]
    %v309 = vld [vmem:[#allocation2 + $0x80] sm:$0xff]
    %v310 = vld [vmem:[#allocation2 + $0x88] sm:$0xff]
    %v311 = vld [vmem:[#allocation2 + $0x90] sm:$0xff]
    %v312 = vld [vmem:[#allocation2 + $0x98] sm:$0xff]
    %v313 = vld [vmem:[#allocation2 + $0xa0] sm:$0xff]
    %v314 = vld [vmem:[#allocation2 + $0xa8] sm:$0xff]
    %v315 = vld [vmem:[#allocation2 + $0xb0] sm:$0xff]
    %v316 = vld [vmem:[#allocation2 + $0xb8] sm:$0xff]
    %v317 = vld [vmem:[#allocation2 + $0xc0] sm:$0xff]
    %v318 = vld [vmem:[#allocation2 + $0xc8] sm:$0xff]
    %v319 = vld [vmem:[#allocation2 + $0xd0] sm:$0xff]
    %v320 = vld [vmem:[#allocation2 + $0xd8] sm:$0xff]
    %v321 = vld [vmem:[#allocation2 + $0xe0] sm:$0xff]
    %v322 = vld [vmem:[#allocation2 + $0xe8] sm:$0xff]
    %v323 = vld [vmem:[#allocation2 + $0xf0] sm:$0xff]
    %v324 = vld [vmem:[#allocation2 + $0xf8] sm:$0xff]
    %v325 = vld [vmem:[%s8] sm:$0x3]
    %v327 = vperm.slane %v325, 0
    %v328 = vperm.slane %v325, 1
    %v363 = vunpack.c.l.b16 %v293
    %v364 = vunpack.c.h.b16 %v293
    %v365 = vunpack.c.l.b16 %v294
    %v366 = vunpack.c.h.b16 %v294
    %v367 = vunpack.c.l.b16 %v295
    %v368 = vunpack.c.h.b16 %v295
    %v369 = vunpack.c.l.b16 %v296
    %v370 = vunpack.c.h.b16 %v296
    %v371 = vunpack.c.l.b16 %v297
    %v372 = vunpack.c.h.b16 %v297
    %v373 = vunpack.c.l.b16 %v298
    %v374 = vunpack.c.h.b16 %v298
    %v375 = vunpack.c.l.b16 %v299
    %v376 = vunpack.c.h.b16 %v299
    %v377 = vunpack.c.l.b16 %v300
    %v378 = vunpack.c.h.b16 %v300
    %v379 = vunpack.c.l.b16 %v301
    %v380 = vunpack.c.h.b16 %v301
    %v381 = vunpack.c.l.b16 %v302
    %v382 = vunpack.c.h.b16 %v302
    %v383 = vunpack.c.l.b16 %v303
    %v384 = vunpack.c.h.b16 %v303
    %v385 = vunpack.c.l.b16 %v304
    %v386 = vunpack.c.h.b16 %v304
    %v387 = vunpack.c.l.b16 %v305
    %v388 = vunpack.c.h.b16 %v305
    %v389 = vunpack.c.l.b16 %v306
    %v390 = vunpack.c.h.b16 %v306
    %v391 = vunpack.c.l.b16 %v307
    %v392 = vunpack.c.h.b16 %v307
    %v393 = vunpack.c.l.b16 %v308
    %v394 = vunpack.c.h.b16 %v308
    %v395 = vunpack.c.l.b16 %v309
    %v396 = vunpack.c.h.b16 %v309
    %v397 = vunpack.c.l.b16 %v310
    %v398 = vunpack.c.h.b16 %v310
    %v399 = vunpack.c.l.b16 %v311
    %v400 = vunpack.c.h.b16 %v311
    %v401 = vunpack.c.l.b16 %v312
    %v402 = vunpack.c.h.b16 %v312
    %v403 = vunpack.c.l.b16 %v313
    %v404 = vunpack.c.h.b16 %v313
    %v405 = vunpack.c.l.b16 %v314
    %v406 = vunpack.c.h.b16 %v314
    %v407 = vunpack.c.l.b16 %v315
    %v408 = vunpack.c.h.b16 %v315
    %v409 = vunpack.c.l.b16 %v316
    %v410 = vunpack.c.h.b16 %v316
    %v411 = vunpack.c.l.b16 %v317
    %v412 = vunpack.c.h.b16 %v317
    %v413 = vunpack.c.l.b16 %v318
    %v414 = vunpack.c.h.b16 %v318
    %v415 = vunpack.c.l.b16 %v319
    %v416 = vunpack.c.h.b16 %v319
    %v417 = vunpack.c.l.b16 %v320
    %v418 = vunpack.c.h.b16 %v320
    %v419 = vunpack.c.l.b16 %v321
    %v420 = vunpack.c.h.b16 %v321
    %v421 = vunpack.c.l.b16 %v322
    %v422 = vunpack.c.h.b16 %v322
    %v423 = vunpack.c.l.b16 %v323
    %v424 = vunpack.c.h.b16 %v323
    %v425 = vunpack.c.l.b16 %v324
    %v426 = vunpack.c.h.b16 %v324
    %v427 = vpack.c.b16 %v365, %v363
    %v428 = vpack.c.b16 %v366, %v364
    %v429 = vpack.c.b16 %v369, %v367
    %v430 = vpack.c.b16 %v370, %v368
    %v431 = vpack.c.b16 %v373, %v371
    %v432 = vpack.c.b16 %v374, %v372
    %v433 = vpack.c.b16 %v377, %v375
    %v434 = vpack.c.b16 %v378, %v376
    %v435 = vpack.c.b16 %v381, %v379
    %v436 = vpack.c.b16 %v382, %v380
    %v437 = vpack.c.b16 %v385, %v383
    %v438 = vpack.c.b16 %v386, %v384
    %v439 = vpack.c.b16 %v389, %v387
    %v440 = vpack.c.b16 %v390, %v388
    %v441 = vpack.c.b16 %v393, %v391
    %v442 = vpack.c.b16 %v394, %v392
    %v443 = vpack.c.b16 %v397, %v395
    %v444 = vpack.c.b16 %v398, %v396
    %v445 = vpack.c.b16 %v401, %v399
    %v446 = vpack.c.b16 %v402, %v400
    %v447 = vpack.c.b16 %v405, %v403
    %v448 = vpack.c.b16 %v406, %v404
    %v449 = vpack.c.b16 %v409, %v407
    %v450 = vpack.c.b16 %v410, %v408
    %v451 = vpack.c.b16 %v413, %v411
    %v452 = vpack.c.b16 %v414, %v412
    %v453 = vpack.c.b16 %v417, %v415
    %v454 = vpack.c.b16 %v418, %v416
    %v455 = vpack.c.b16 %v421, %v419
    %v456 = vpack.c.b16 %v422, %v420
    %v457 = vpack.c.b16 %v425, %v423
    %v458 = vpack.c.b16 %v426, %v424
    %491 = vmatpush.bf16.msra.mxu0 %v441
    %492 = vmatpush.bf16.msra.mxu0 %v439
    %493 = vmatpush.bf16.msra.mxu0 %v437
    %494 = vmatpush.bf16.msra.mxu0 %v435
    %495 = vmatpush.bf16.msra.mxu0 %v433
    %496 = vmatpush.bf16.msra.mxu0 %v431
    %497 = vmatpush.bf16.msra.mxu0 %v429
    %498 = vmatpush.bf16.msra.mxu0 %v427
    %499 = vmatmul.bf16.gmra.mxu0 %v291
    %v500 = vpop.f32.mrf.mxu0
    %v501 = vadd.f32 %v327, %v500
    %v502 = vpop.f32.mrf.mxu0
    %v503 = vadd.f32 %v327, %v502
    %504 = vdwg.mxu0
    %505 = vmatpush.bf16.msra.mxu0 %v457
    %506 = vmatpush.bf16.msra.mxu0 %v455
    %507 = vmatpush.bf16.msra.mxu0 %v453
    %508 = vmatpush.bf16.msra.mxu0 %v451
    %509 = vmatpush.bf16.msra.mxu0 %v449
    %510 = vmatpush.bf16.msra.mxu0 %v447
    %511 = vmatpush.bf16.msra.mxu0 %v445
    %512 = vmatpush.bf16.msra.mxu0 %v443
    %513 = vmatmul.bf16.gmra.mxu0 %v292
    %v514 = vpop.f32.mrf.mxu0
    %v515 = vadd.f32 %v501, %v514
    %v516 = vpop.f32.mrf.mxu0
    %v517 = vadd.f32 %v503, %v516
    %518 = vdwg.mxu0
    %519 = vmatpush.bf16.msra.mxu0 %v442
    %520 = vmatpush.bf16.msra.mxu0 %v440
    %521 = vmatpush.bf16.msra.mxu0 %v438
    %522 = vmatpush.bf16.msra.mxu0 %v436
    %523 = vmatpush.bf16.msra.mxu0 %v434
    %524 = vmatpush.bf16.msra.mxu0 %v432
    %525 = vmatpush.bf16.msra.mxu0 %v430
    %526 = vmatpush.bf16.msra.mxu0 %v428
    %527 = vmatmul.bf16.gmra.mxu0 %v291
    %v528 = vpop.f32.mrf.mxu0
    %v529 = vadd.f32 %v328, %v528
    %v530 = vpop.f32.mrf.mxu0
    %v531 = vadd.f32 %v328, %v530
    %532 = vdwg.mxu0
    %533 = vmatpush.bf16.msra.mxu0 %v458
    %534 = vmatpush.bf16.msra.mxu0 %v456
    %535 = vmatpush.bf16.msra.mxu0 %v454
    %536 = vmatpush.bf16.msra.mxu0 %v452
    %537 = vmatpush.bf16.msra.mxu0 %v450
    %538 = vmatpush.bf16.msra.mxu0 %v448
    %539 = vmatpush.bf16.msra.mxu0 %v446
    %540 = vmatpush.bf16.msra.mxu0 %v444
    %541 = vmatmul.bf16.gmra.mxu0 %v292
    %v542 = vpop.f32.mrf.mxu0
    %v543 = vadd.f32 %v529, %v542
    %v544 = vpop.f32.mrf.mxu0
    %v545 = vadd.f32 %v531, %v544
    %546 = vdwg.mxu0
    %v547 = vmax.f32 %v515, 0.0
    %v548 = vmax.f32 %v543, 0.0
    %v549 = vmax.f32 %v517, 0.0
    %v550 = vmax.f32 %v545, 0.0
    %v551 = vpack.c.bf16 %v549, %v547
    %v552 = vpack.c.bf16 %v550, %v548
    %v553 = vld [vmem:[%s9] sm:$0xf]
    %v554 = vld [vmem:[%s9 + $0x4] sm:$0xf]
    %v555 = vld [vmem:[%s9 + $0x8] sm:$0xf]
    %v556 = vld [vmem:[%s9 + $0xc] sm:$0xf]
    %v557 = vld [vmem:[%s9 + $0x10] sm:$0xf]
    %v558 = vld [vmem:[%s9 + $0x14] sm:$0xf]
    %v559 = vld [vmem:[%s9 + $0x18] sm:$0xf]
    %v560 = vld [vmem:[%s9 + $0x1c] sm:$0xf]
    %v561 = vld [vmem:[%s9 + $0x20] sm:$0xf]
    %v562 = vld [vmem:[%s9 + $0x24] sm:$0xf]
    %v563 = vld [vmem:[%s9 + $0x28] sm:$0xf]
    %v564 = vld [vmem:[%s9 + $0x2c] sm:$0xf]
    %v565 = vld [vmem:[%s9 + $0x30] sm:$0xf]
    %v566 = vld [vmem:[%s9 + $0x34] sm:$0xf]
    %v567 = vld [vmem:[%s9 + $0x38] sm:$0xf]
    %v568 = vld [vmem:[%s9 + $0x3c] sm:$0xf]
    %v569 = vld [vmem:[%s9 + $0x40] sm:$0xf]
    %v570 = vld [vmem:[%s9 + $0x44] sm:$0xf]
    %v571 = vld [vmem:[%s9 + $0x48] sm:$0xf]
    %v572 = vld [vmem:[%s9 + $0x4c] sm:$0xf]
    %v573 = vld [vmem:[%s9 + $0x50] sm:$0xf]
    %v574 = vld [vmem:[%s9 + $0x54] sm:$0xf]
    %v575 = vld [vmem:[%s9 + $0x58] sm:$0xf]
    %v576 = vld [vmem:[%s9 + $0x5c] sm:$0xf]
    %v577 = vld [vmem:[%s9 + $0x60] sm:$0xf]
    %v578 = vld [vmem:[%s9 + $0x64] sm:$0xf]
    %v579 = vld [vmem:[%s9 + $0x68] sm:$0xf]
    %v580 = vld [vmem:[%s9 + $0x6c] sm:$0xf]
    %v581 = vld [vmem:[%s9 + $0x70] sm:$0xf]
    %v582 = vld [vmem:[%s9 + $0x74] sm:$0xf]
    %v583 = vld [vmem:[%s9 + $0x78] sm:$0xf]
    %v584 = vld [vmem:[%s9 + $0x7c] sm:$0xf]
    %v585 = vld [vmem:[%s10] sm:$0x1]
    %v587 = vperm.slane %v585, 0
    %v621 = vunpack.c.l.b16 %v553
    %v622 = vunpack.c.l.b16 %v554
    %v623 = vunpack.c.l.b16 %v555
    %v624 = vunpack.c.l.b16 %v556
    %v625 = vunpack.c.l.b16 %v557
    %v626 = vunpack.c.l.b16 %v558
    %v627 = vunpack.c.l.b16 %v559
    %v628 = vunpack.c.l.b16 %v560
    %v629 = vunpack.c.l.b16 %v561
    %v630 = vunpack.c.l.b16 %v562
    %v631 = vunpack.c.l.b16 %v563
    %v632 = vunpack.c.l.b16 %v564
    %v633 = vunpack.c.l.b16 %v565
    %v634 = vunpack.c.l.b16 %v566
    %v635 = vunpack.c.l.b16 %v567
    %v636 = vunpack.c.l.b16 %v568
    %v637 = vunpack.c.l.b16 %v569
    %v638 = vunpack.c.l.b16 %v570
    %v639 = vunpack.c.l.b16 %v571
    %v640 = vunpack.c.l.b16 %v572
    %v641 = vunpack.c.l.b16 %v573
    %v642 = vunpack.c.l.b16 %v574
    %v643 = vunpack.c.l.b16 %v575
    %v644 = vunpack.c.l.b16 %v576
    %v645 = vunpack.c.l.b16 %v577
    %v646 = vunpack.c.l.b16 %v578
    %v647 = vunpack.c.l.b16 %v579
    %v648 = vunpack.c.l.b16 %v580
    %v649 = vunpack.c.l.b16 %v581
    %v650 = vunpack.c.l.b16 %v582
    %v651 = vunpack.c.l.b16 %v583
    %v652 = vunpack.c.l.b16 %v584
    %v653 = vpack.c.b16 %v622, %v621
    %v654 = vpack.c.b16 %v624, %v623
    %v655 = vpack.c.b16 %v626, %v625
    %v656 = vpack.c.b16 %v628, %v627
    %v657 = vpack.c.b16 %v630, %v629
    %v658 = vpack.c.b16 %v632, %v631
    %v659 = vpack.c.b16 %v634, %v633
    %v660 = vpack.c.b16 %v636, %v635
    %v661 = vpack.c.b16 %v638, %v637
    %v662 = vpack.c.b16 %v640, %v639
    %v663 = vpack.c.b16 %v642, %v641
    %v664 = vpack.c.b16 %v644, %v643
    %v665 = vpack.c.b16 %v646, %v645
    %v666 = vpack.c.b16 %v648, %v647
    %v667 = vpack.c.b16 %v650, %v649
    %v668 = vpack.c.b16 %v652, %v651
    %685 = vmatpush.bf16.msra.mxu0 %v660
    %686 = vmatpush.bf16.msra.mxu0 %v659
    %687 = vmatpush.bf16.msra.mxu0 %v658
    %688 = vmatpush.bf16.msra.mxu0 %v657
    %689 = vmatpush.bf16.msra.mxu0 %v656
    %690 = vmatpush.bf16.msra.mxu0 %v655
    %691 = vmatpush.bf16.msra.mxu0 %v654
    %692 = vmatpush.bf16.msra.mxu0 %v653
    %693 = vmatmul.bf16.gmra.mxu0 %v551
    %v694 = vpop.f32.mrf.mxu0
    %v695 = vadd.f32 %v587, %v694
    %v696 = vpop.f32.mrf.mxu0
    %v697 = vadd.f32 %v587, %v696
    %698 = vdwg.mxu0
    %699 = vmatpush.bf16.msra.mxu0 %v668
    %700 = vmatpush.bf16.msra.mxu0 %v667
    %701 = vmatpush.bf16.msra.mxu0 %v666
    %702 = vmatpush.bf16.msra.mxu0 %v665
    %703 = vmatpush.bf16.msra.mxu0 %v664
    %704 = vmatpush.bf16.msra.mxu0 %v663
    %705 = vmatpush.bf16.msra.mxu0 %v662
    %706 = vmatpush.bf16.msra.mxu0 %v661
    %707 = vmatmul.bf16.gmra.mxu0 %v552
    %v708 = vpop.f32.mrf.mxu0
    %v709 = vadd.f32 %v695, %v708
    %v710 = vpop.f32.mrf.mxu0
    %v711 = vadd.f32 %v697, %v710
    %712 = vdwg.mxu0
    %v713 = vtanh.pop %v709
    %v714 = vtanh.pop %v711
    %vm715 = vcmask 261120
    %716 = vst.msk [vmem:[#allocation5] sm:$0xff] %vm715, %v713
    %717 = vst.msk [vmem:[#allocation5 + $0x8] sm:$0xff] %vm715, %v714
    // Predicated region
    $region50: #{tpu_custom_call.1} parent=1 // pred_check
      _
    $region51: #{tpu_custom_call.1} parent=1 // pred_check_branch
      %719 = sbr.rel (0) target = $region53
    $region52: #{tpu_custom_call.1} parent=1 // pred_region
      %721 = vsyncadd [#allocation4], 0
      %s722 = sshll.u32 [#allocation5], 4
      %s723 = int_to_ptr.vmem [resolvable:$true] %s722
      %s724 = sshll.u32 %s11, 4
      %s725 = int_to_ptr.hbm [resolvable:$true] %s724
      %730 = dma.vmem_to_hbm [thread:$0]  %s723, 256, %s725, [#allocation4], 128, 128, 8
    $region53: #{tpu_custom_call.1} parent=1 // pred_fallthru
      _
    // Predicated region
    $region54: #{tpu_custom_call.1} parent=1 // pred_check
      _
    $region55: #{tpu_custom_call.1} parent=1 // pred_check_branch
      %732 = sbr.rel (0) target = $region57
    $region56: #{tpu_custom_call.1} parent=1 // pred_region
      %734 = dma.done [#allocation4], 256
    $region57: #{tpu_custom_call.1} parent=1 // pred_fallthru
      _
    %735 = vsyncpa [#allocation3], 1
    %736 = vsyncpa [#allocation4], 1

</llo_original>
